<compile_context>
chip_gen: v6e
topology: v6e:2x2x1
jax: 0.10.0
libtpu: 0.0.40
codegen_flags: <defaults>
</compile_context>

<pallas_src>
import functools

import jax
import jax.numpy as jnp
from jax.experimental import pallas as pl
from jax.experimental.pallas import tpu as pltpu


def _round_up(n, m):
    return ((n + m - 1) // m) * m


def decoder_kernel(x_ref, w1_ref, b1_ref, w2_ref, b2_ref, w3_ref, b3_ref, o_ref):
    """One batch tile: fc1+ReLU -> fc2+ReLU -> fc3 (no final ReLU)."""
    x = x_ref[...]                                                   # (tb, 64)
    h1 = jnp.dot(x, w1_ref[...], preferred_element_type=jnp.float32) + b1_ref[...]
    h1 = jnp.maximum(h1, 0.0)                                        # (tb, 128) f32
    h2 = jnp.dot(h1.astype(w2_ref.dtype), w2_ref[...],
                 preferred_element_type=jnp.float32) + b2_ref[...]
    h2 = jnp.maximum(h2, 0.0)                                        # (tb, 64) f32
    h3 = jnp.dot(h2.astype(w3_ref.dtype), w3_ref[...],
                 preferred_element_type=jnp.float32) + b3_ref[...]   # (tb, out)
    o_ref[...] = h3.astype(o_ref.dtype)


@functools.partial(jax.jit, static_argnames=("block_b", "compute_dtype"))
def decoder_forward(x, params, *, block_b=256, compute_dtype=jnp.float32):
    """x: (B, encoding_size). Returns (B, output_dim) float32.

    compute_dtype=jnp.bfloat16 casts x and weights to bf16 (MXU-native on v6e/v7x)
    while keeping f32 accumulation and f32 biases/output.
    """
    B, in_dim = x.shape
    w1, b1 = params["w1"], params["b1"]
    w2, b2 = params["w2"], params["b2"]
    w3, b3 = params["w3"], params["b3"]
    out_dim = w3.shape[1]

    xc = x.astype(compute_dtype)
    w1c, w2c, w3c = (w.astype(compute_dtype) for w in (w1, w2, w3))
    b1f, b2f, b3f = (b.astype(jnp.float32) for b in (b1, b2, b3))

    # Batch tile: multiple of 8 (f32 sublane), capped at block_b rows per MXU pass.
    tb = min(block_b, _round_up(B, 8))
    b_pad = _round_up(B, tb)
    if b_pad != B:
        xc = jnp.pad(xc, ((0, b_pad - B), (0, 0)))

    grid = (b_pad // tb,)

    # Weights/biases: constant index_map -> loaded once, resident in VMEM.
    const = lambda shape: pl.BlockSpec(shape, lambda i: (0,) * len(shape))

    out_padded = pl.pallas_call(
        decoder_kernel,
        out_shape=jax.ShapeDtypeStruct((b_pad, out_dim), jnp.float32),
        grid_spec=pltpu.PrefetchScalarGridSpec(
            num_scalar_prefetch=0,
            grid=grid,
            in_specs=[
                pl.BlockSpec((tb, in_dim), lambda i: (i, 0)),   # x: pipelined per tile
                const(w1c.shape), const(b1f.shape),
                const(w2c.shape), const(b2f.shape),
                const(w3c.shape), const(b3f.shape),
            ],
            out_specs=pl.BlockSpec((tb, out_dim), lambda i: (i, 0)),
        ),
        compiler_params=pltpu.CompilerParams(
            dimension_semantics=("parallel",),   # shard batch tiles across TCs (v7x)
        ),
    )(xc, w1c, b1f, w2c, b2f, w3c, b3f)

    return out_padded[:B] if b_pad != B else out_padded


def init_params(key, encoding_size=64, output_dim=1):
    """Matches nn.Linear default init: U(-1/sqrt(fan_in), 1/sqrt(fan_in)).
    Weights stored as (in_dim, out_dim) so the kernel computes x @ W + b."""
    dims = [encoding_size, 128, 64, output_dim]
    params = {}
    keys = jax.random.split(key, 2 * (len(dims) - 1))
    for i in range(len(dims) - 1):
        fan_in, fan_out = dims[i], dims[i + 1]
        bound = 1.0 / (fan_in ** 0.5)
        params[f"w{i + 1}"] = jax.random.uniform(
            keys[2 * i], (fan_in, fan_out), minval=-bound, maxval=bound,
            dtype=jnp.float32)
        params[f"b{i + 1}"] = jax.random.uniform(
            keys[2 * i + 1], (1, fan_out), minval=-bound, maxval=bound,
            dtype=jnp.float32)
    return params


def decoder_reference(x, params):
    h = jnp.maximum(x @ params["w1"] + params["b1"], 0.0)
    h = jnp.maximum(h @ params["w2"] + params["b2"], 0.0)
    return h @ params["w3"] + params["b3"]


if __name__ == "__main__":
    key = jax.random.PRNGKey(0)
    k_x, k_x2, k_p = jax.random.split(key, 3)

    encoding_size = 64
    output_dim = 1
    params = init_params(k_p, encoding_size, output_dim)

    # Small batch (single tile).
    x_small = jax.random.normal(k_x, (8, encoding_size), dtype=jnp.float32)
    out_small = jax.block_until_ready(decoder_forward(x_small, params))
    ref_small = decoder_reference(x_small, params)
    assert out_small.shape == (8, output_dim), out_small.shape
    assert jnp.allclose(out_small, ref_small, atol=1e-4, rtol=1e-4), "f32 small-batch mismatch"

    # Multi-tile batch with padding (exercises the batch grid + resident weights).
    x_big = jax.random.normal(k_x2, (384, encoding_size), dtype=jnp.float32)
    out_big = jax.block_until_ready(decoder_forward(x_big, params, block_b=256))
    ref_big = decoder_reference(x_big, params)
    assert out_big.shape == (384, output_dim), out_big.shape
    assert jnp.allclose(out_big, ref_big, atol=1e-4, rtol=1e-4), "f32 multi-tile mismatch"

    # bf16 compute path (v6e / v7x MXU-native), f32 accumulation -> looser tolerance.
    out_bf16 = jax.block_until_ready(
        decoder_forward(x_big, params, block_b=256, compute_dtype=jnp.bfloat16))
    assert out_bf16.shape == (384, output_dim), out_bf16.shape
    assert jnp.allclose(out_bf16, ref_big, atol=5e-2, rtol=5e-2), "bf16 mismatch"

    print("KERNEL_OK")
</pallas_src>

<mosaic_0001>
module attributes {stable_mosaic.version = 11 : i64} {
  func.func @decoder_kernel(%arg0: i32, %arg1: memref<8x64xf32, #tpu.memory_space<vmem>>, %arg2: memref<64x128xf32, #tpu.memory_space<vmem>>, %arg3: memref<1x128xf32, #tpu.memory_space<vmem>>, %arg4: memref<128x64xf32, #tpu.memory_space<vmem>>, %arg5: memref<1x64xf32, #tpu.memory_space<vmem>>, %arg6: memref<64x1xf32, #tpu.memory_space<vmem>>, %arg7: memref<1x1xf32, #tpu.memory_space<vmem>>, %arg8: memref<8x1xf32, #tpu.memory_space<vmem>>) attributes {dimension_semantics = [#tpu.dimension_semantics<parallel>], iteration_bounds = array<i64: 1>, scalar_prefetch = 0 : i64, scratch_operands = 0 : i64, tpu.core_type = #tpu.core_type<tc>, window_params = [{transform_indices = @transform_0, window_bounds = array<i64: 8, 64>}, {pipeline_mode = #tpu.pipeline_mode<synchronous>, transform_indices = @transform_1, window_bounds = array<i64: 64, 128>}, {pipeline_mode = #tpu.pipeline_mode<synchronous>, transform_indices = @transform_2, window_bounds = array<i64: 1, 128>}, {pipeline_mode = #tpu.pipeline_mode<synchronous>, transform_indices = @transform_3, window_bounds = array<i64: 128, 64>}, {pipeline_mode = #tpu.pipeline_mode<synchronous>, transform_indices = @transform_4, window_bounds = array<i64: 1, 64>}, {pipeline_mode = #tpu.pipeline_mode<synchronous>, transform_indices = @transform_5, window_bounds = array<i64: 64, 1>}, {pipeline_mode = #tpu.pipeline_mode<synchronous>, transform_indices = @transform_6, window_bounds = array<i64: 1, 1>}, {transform_indices = @transform_7, window_bounds = array<i64: 8, 1>}]} {
    %c0 = arith.constant 0 : index
    %c0_0 = arith.constant 0 : index
    %0 = vector.load %arg1[%c0, %c0_0] : memref<8x64xf32, #tpu.memory_space<vmem>>, vector<8x64xf32>
    %c0_1 = arith.constant 0 : index
    %c0_2 = arith.constant 0 : index
    %1 = vector.load %arg2[%c0_1, %c0_2] : memref<64x128xf32, #tpu.memory_space<vmem>>, vector<64x128xf32>
    %cst = arith.constant dense<0.000000e+00> : vector<8x128xf32>
    %2 = tpu.matmul %0, %1, %cst {dimension_numbers = #tpu.dot_dimension_numbers<[1], [0], [0], [1], [0, 0, 1, 1], [], []>} : vector<8x64xf32>, vector<64x128xf32>, vector<8x128xf32> -> vector<8x128xf32>
    %c0_3 = arith.constant 0 : index
    %c0_4 = arith.constant 0 : index
    %3 = vector.load %arg3[%c0_3, %c0_4] : memref<1x128xf32, #tpu.memory_space<vmem>>, vector<1x128xf32>
    %4 = vector.broadcast %3 : vector<1x128xf32> to vector<8x128xf32>
    %5 = arith.addf %2, %4 : vector<8x128xf32>
    %cst_5 = arith.constant 0.000000e+00 : f32
    %6 = vector.broadcast %cst_5 : f32 to vector<8x128xf32>
    %7 = arith.maximumf %5, %6 : vector<8x128xf32>
    %c0_6 = arith.constant 0 : index
    %c0_7 = arith.constant 0 : index
    %8 = vector.load %arg4[%c0_6, %c0_7] : memref<128x64xf32, #tpu.memory_space<vmem>>, vector<128x64xf32>
    %cst_8 = arith.constant dense<0.000000e+00> : vector<8x64xf32>
    %9 = tpu.matmul %7, %8, %cst_8 {dimension_numbers = #tpu.dot_dimension_numbers<[1], [0], [0], [1], [0, 0, 1, 1], [], []>} : vector<8x128xf32>, vector<128x64xf32>, vector<8x64xf32> -> vector<8x64xf32>
    %c0_9 = arith.constant 0 : index
    %c0_10 = arith.constant 0 : index
    %10 = vector.load %arg5[%c0_9, %c0_10] : memref<1x64xf32, #tpu.memory_space<vmem>>, vector<1x64xf32>
    %11 = vector.broadcast %10 : vector<1x64xf32> to vector<8x64xf32>
    %12 = arith.addf %9, %11 : vector<8x64xf32>
    %cst_11 = arith.constant 0.000000e+00 : f32
    %13 = vector.broadcast %cst_11 : f32 to vector<8x64xf32>
    %14 = arith.maximumf %12, %13 : vector<8x64xf32>
    %c0_12 = arith.constant 0 : index
    %c0_13 = arith.constant 0 : index
    %15 = vector.load %arg6[%c0_12, %c0_13] : memref<64x1xf32, #tpu.memory_space<vmem>>, vector<64x1xf32>
    %cst_14 = arith.constant dense<0.000000e+00> : vector<8x1xf32>
    %16 = tpu.matmul %14, %15, %cst_14 {dimension_numbers = #tpu.dot_dimension_numbers<[1], [0], [0], [1], [0, 0, 1, 1], [], []>} : vector<8x64xf32>, vector<64x1xf32>, vector<8x1xf32> -> vector<8x1xf32>
    %c0_15 = arith.constant 0 : index
    %c0_16 = arith.constant 0 : index
    %17 = vector.load %arg7[%c0_15, %c0_16] : memref<1x1xf32, #tpu.memory_space<vmem>>, vector<1x1xf32>
    %18 = vector.broadcast %17 : vector<1x1xf32> to vector<8x1xf32>
    %19 = arith.addf %16, %18 : vector<8x1xf32>
    %c0_17 = arith.constant 0 : index
    %c0_18 = arith.constant 0 : index
    %20 = vector.load %arg8[%c0_17, %c0_18] : memref<8x1xf32, #tpu.memory_space<vmem>>, vector<8x1xf32>
    tpu.vector_store %arg8[%c0_17, %c0_18], %19 {strides = array<i32>} : memref<8x1xf32, #tpu.memory_space<vmem>>, vector<8x1xf32>,
    return
  }
  func.func @transform_0(%arg0: i32) -> (i32, i32) {
    %c0_i32 = arith.constant 0 : i32
    %c0_i32_0 = arith.constant 0 : i32
    return %arg0, %c0_i32 : i32, i32
  }
  func.func @transform_1(%arg0: i32) -> (i32, i32) {
    %c0_i32 = arith.constant 0 : i32
    %c0_i32_0 = arith.constant 0 : i32
    %c0_i32_1 = arith.constant 0 : i32
    return %c0_i32, %c0_i32_0 : i32, i32
  }
  func.func @transform_2(%arg0: i32) -> (i32, i32) {
    %c0_i32 = arith.constant 0 : i32
    %c0_i32_0 = arith.constant 0 : i32
    %c0_i32_1 = arith.constant 0 : i32
    return %c0_i32, %c0_i32_0 : i32, i32
  }
  func.func @transform_3(%arg0: i32) -> (i32, i32) {
    %c0_i32 = arith.constant 0 : i32
    %c0_i32_0 = arith.constant 0 : i32
    %c0_i32_1 = arith.constant 0 : i32
    return %c0_i32, %c0_i32_0 : i32, i32
  }
  func.func @transform_4(%arg0: i32) -> (i32, i32) {
    %c0_i32 = arith.constant 0 : i32
    %c0_i32_0 = arith.constant 0 : i32
    %c0_i32_1 = arith.constant 0 : i32
    return %c0_i32, %c0_i32_0 : i32, i32
  }
  func.func @transform_5(%arg0: i32) -> (i32, i32) {
    %c0_i32 = arith.constant 0 : i32
    %c0_i32_0 = arith.constant 0 : i32
    %c0_i32_1 = arith.constant 0 : i32
    return %c0_i32, %c0_i32_0 : i32, i32
  }
  func.func @transform_6(%arg0: i32) -> (i32, i32) {
    %c0_i32 = arith.constant 0 : i32
    %c0_i32_0 = arith.constant 0 : i32
    %c0_i32_1 = arith.constant 0 : i32
    return %c0_i32, %c0_i32_0 : i32, i32
  }
  func.func @transform_7(%arg0: i32) -> (i32, i32) {
    %c0_i32 = arith.constant 0 : i32
    %c0_i32_0 = arith.constant 0 : i32
    return %arg0, %c0_i32 : i32, i32
  }
}

</mosaic_0001>

<llo_original>
// kernel: decoder_forward.1
$region0: #{decoder_forward.1}
  #allocation0 [shape = 'u32[]', space=smem, size = 0x4, offset = 0x4, fixed_abs, tag = 'smem constant byte address 0x4 - core index']
  #allocation1 [shape = 'u32[144,128]{1,0:T(1,128)}', space=vmem, size = 0x12000, scoped, tag = 'internal scratch']
  #allocation2 [shape = 'f32[1,1]{1,0:T(1,128)S(1)}', space=vmem, size = 0x200, scoped, tag = 'scoped memory for decoder_forward.1']
  %s0 = inlined_call_operand.vmem [shape: f32[8,64], index: 0, kind: input, shape index: {}]
  %s1 = inlined_call_operand.vmem [shape: f32[64,128], index: 1, kind: input, shape index: {}]
  %s2 = inlined_call_operand.vmem [shape: f32[1,128], index: 2, kind: input, shape index: {}]
  %s3 = inlined_call_operand.vmem [shape: f32[128,64], index: 3, kind: input, shape index: {}]
  %s4 = inlined_call_operand.vmem [shape: f32[1,64], index: 4, kind: input, shape index: {}]
  %s5 = inlined_call_operand.vmem [shape: f32[64,1], index: 5, kind: input, shape index: {}]
  %s6 = inlined_call_operand.<no memory space> [shape: f32[1,1], index: 6, kind: input, shape index: {}]
  %s7 = inlined_call_operand.vmem [shape: f32[8,1], index: 7, kind: output, shape index: {}]
  %s8 = sld [smem:[#allocation0]]
  $region38: #{decoder_forward.1} parent=0
    _
  %s10 = ssub.s32 1, %s8
  %s11 = scalar_select 0, %s10, %s8
  %v12 = vstv %s6
  %13 = vst [vmem:[#allocation2] sm:$0x1] %v12
  // Predicated region
  $region2: #{decoder_forward.1} parent=0 // pred_check
    _
  $region3: #{decoder_forward.1} parent=0 // pred_check_branch
    %15 = sbr.rel (0) target = $region5
  $region4: #{decoder_forward.1} parent=0 // pred_region
    _
  $region5: #{decoder_forward.1} parent=0 // pred_fallthru
    _
  // Predicated region
  $region6: #{decoder_forward.1} parent=0 // pred_check
    _
  $region7: #{decoder_forward.1} parent=0 // pred_check_branch
    %17 = sbr.rel (0) target = $region9
  $region8: #{decoder_forward.1} parent=0 // pred_region
    _
  $region9: #{decoder_forward.1} parent=0 // pred_fallthru
    _
  // Predicated region
  $region10: #{decoder_forward.1} parent=0 // pred_check
    _
  $region11: #{decoder_forward.1} parent=0 // pred_check_branch
    %19 = sbr.rel (0) target = $region13
  $region12: #{decoder_forward.1} parent=0 // pred_region
    _
  $region13: #{decoder_forward.1} parent=0 // pred_fallthru
    _
  // Predicated region
  $region14: #{decoder_forward.1} parent=0 // pred_check
    _
  $region15: #{decoder_forward.1} parent=0 // pred_check_branch
    %21 = sbr.rel (0) target = $region17
  $region16: #{decoder_forward.1} parent=0 // pred_region
    _
  $region17: #{decoder_forward.1} parent=0 // pred_fallthru
    _
  // Predicated region
  $region18: #{decoder_forward.1} parent=0 // pred_check
    _
  $region19: #{decoder_forward.1} parent=0 // pred_check_branch
    %23 = sbr.rel (0) target = $region21
  $region20: #{decoder_forward.1} parent=0 // pred_region
    _
  $region21: #{decoder_forward.1} parent=0 // pred_fallthru
    _
  // Predicated region
  $region22: #{decoder_forward.1} parent=0 // pred_check
    _
  $region23: #{decoder_forward.1} parent=0 // pred_check_branch
    %25 = sbr.rel (0) target = $region25
  $region24: #{decoder_forward.1} parent=0 // pred_region
    _
  $region25: #{decoder_forward.1} parent=0 // pred_fallthru
    _
  // Predicated region
  $region26: #{decoder_forward.1} parent=0 // pred_check
    _
  $region27: #{decoder_forward.1} parent=0 // pred_check_branch
    %27 = sbr.rel (0) target = $region29
  $region28: #{decoder_forward.1} parent=0 // pred_region
    _
  $region29: #{decoder_forward.1} parent=0 // pred_fallthru
    _
  %v28 = vld [vmem:[%s0] sm:$0xff]
  %v29 = vld [vmem:[%s1] sm:$0xff]
  %v30 = vld [vmem:[%s1 + $0x8] sm:$0xff]
  %v31 = vld [vmem:[%s1 + $0x10] sm:$0xff]
  %v32 = vld [vmem:[%s1 + $0x18] sm:$0xff]
  %v33 = vld [vmem:[%s1 + $0x20] sm:$0xff]
  %v34 = vld [vmem:[%s1 + $0x28] sm:$0xff]
  %v35 = vld [vmem:[%s1 + $0x30] sm:$0xff]
  %v36 = vld [vmem:[%s1 + $0x38] sm:$0xff]
  %v37 = vld [vmem:[%s2] sm:$0x1]
  %v39 = vlaneseq
  %v40 = vshrl.u32 %v39, 7
  %v41 = vsub.s32 0, %v40
  %v42 = vrot.slane %v37, %v41
  %vm44 = vcmask 523264
  %v46 = vsel %vm44, %v28, 0
  %48 = vmatprep.subr.mxu0 0.0
  %49 = vmatpush1.msra.mxu0 0.0
  %50 = vmatprep.subr.mxu0 0.0
  %51 = vmatpush1.msra.mxu0 0.0
  %52 = vmatprep.subr.mxu0 0.0
  %53 = vmatpush1.msra.mxu0 0.0
  %54 = vmatprep.subr.mxu0 0.0
  %55 = vmatpush1.msra.mxu0 0.0
  %56 = vmatprep.subr.mxu0 0.0
  %57 = vmatpush1.msra.mxu0 0.0
  %58 = vmatprep.subr.mxu0 0.0
  %59 = vmatpush1.msra.mxu0 0.0
  %60 = vmatprep.subr.mxu0 0.0
  %61 = vmatpush1.msra.mxu0 0.0
  %62 = vmatprep.subr.mxu0 0.0
  %63 = vmatpush1.msra.mxu0 0.0
  %64 = vmatprep.subr.mxu0 0.0
  %65 = vmatpush1.msra.mxu0 %v36
  %66 = vmatprep.subr.mxu0 0.0
  %67 = vmatpush1.msra.mxu0 %v35
  %68 = vmatprep.subr.mxu0 0.0
  %69 = vmatpush1.msra.mxu0 %v34
  %70 = vmatprep.subr.mxu0 0.0
  %71 = vmatpush1.msra.mxu0 %v33
  %72 = vmatprep.subr.mxu0 0.0
  %73 = vmatpush1.msra.mxu0 %v32
  %74 = vmatprep.subr.mxu0 0.0
  %75 = vmatpush1.msra.mxu0 %v31
  %76 = vmatprep.subr.mxu0 0.0
  %77 = vmatpush1.msra.mxu0 %v30
  %78 = vmatprep.subr.mxu0 0.0
  %79 = vmatpush1.msra.mxu0 %v29
  %80 = vmatprep.subr.mxu0 0.0
  %81 = vmatpush2.msra.mxu0 0.0
  %82 = vmatprep.subr.mxu0 0.0
  %83 = vmatpush2.msra.mxu0 0.0
  %84 = vmatprep.subr.mxu0 0.0
  %85 = vmatpush2.msra.mxu0 0.0
  %86 = vmatprep.subr.mxu0 0.0
  %87 = vmatpush2.msra.mxu0 0.0
  %88 = vmatprep.subr.mxu0 0.0
  %89 = vmatpush2.msra.mxu0 0.0
  %90 = vmatprep.subr.mxu0 0.0
  %91 = vmatpush2.msra.mxu0 0.0
  %92 = vmatprep.subr.mxu0 0.0
  %93 = vmatpush2.msra.mxu0 0.0
  %94 = vmatprep.subr.mxu0 0.0
  %95 = vmatpush2.msra.mxu0 0.0
  %96 = vmatprep.subr.mxu0 0.0
  %97 = vmatpush2.msra.mxu0 0.0
  %98 = vmatprep.subr.mxu0 0.0
  %99 = vmatpush2.msra.mxu0 0.0
  %100 = vmatprep.subr.mxu0 0.0
  %101 = vmatpush2.msra.mxu0 0.0
  %102 = vmatprep.subr.mxu0 0.0
  %103 = vmatpush2.msra.mxu0 0.0
  %104 = vmatprep.subr.mxu0 0.0
  %105 = vmatpush2.msra.mxu0 0.0
  %106 = vmatprep.subr.mxu0 0.0
  %107 = vmatpush2.msra.mxu0 0.0
  %108 = vmatprep.subr.mxu0 0.0
  %109 = vmatpush2.msra.mxu0 0.0
  %110 = vmatprep.subr.mxu0 0.0
  %111 = vmatpush2.msra.mxu0 0.0
  %112 = vmatprep.mubr.f32.mxu0 0.0
  %113 = vmatmul.mubr.f32.gmra.mxu0 %v46
  %v114 = vpop.f32.mrf.mxu0
  %v115 = vadd.f32 %v42, %v114
  %v116 = vpop.f32.mrf.mxu0
  %117 = vdwg.mxu0
  %v118 = vmax.f32 %v115, 0.0
  %v119 = vld [vmem:[%s3] sm:$0xff]
  %v120 = vld [vmem:[%s3 + $0x8] sm:$0xff]
  %v121 = vld [vmem:[%s3 + $0x10] sm:$0xff]
  %v122 = vld [vmem:[%s3 + $0x18] sm:$0xff]
  %v123 = vld [vmem:[%s3 + $0x20] sm:$0xff]
  %v124 = vld [vmem:[%s3 + $0x28] sm:$0xff]
  %v125 = vld [vmem:[%s3 + $0x30] sm:$0xff]
  %v126 = vld [vmem:[%s3 + $0x38] sm:$0xff]
  %v127 = vld [vmem:[%s3 + $0x40] sm:$0xff]
  %v128 = vld [vmem:[%s3 + $0x48] sm:$0xff]
  %v129 = vld [vmem:[%s3 + $0x50] sm:$0xff]
  %v130 = vld [vmem:[%s3 + $0x58] sm:$0xff]
  %v131 = vld [vmem:[%s3 + $0x60] sm:$0xff]
  %v132 = vld [vmem:[%s3 + $0x68] sm:$0xff]
  %v133 = vld [vmem:[%s3 + $0x70] sm:$0xff]
  %v134 = vld [vmem:[%s3 + $0x78] sm:$0xff]
  %v135 = vld [vmem:[%s4] sm:$0x1]
  %v137 = vlaneseq
  %v138 = vshrl.u32 %v137, 7
  %v139 = vsub.s32 0, %v138
  %v140 = vrot.slane %v135, %v139
  %142 = vmatprep.subr.mxu0 0.0
  %143 = vmatpush1.msra.mxu0 %v134
  %144 = vmatprep.subr.mxu0 0.0
  %145 = vmatpush1.msra.mxu0 %v133
  %146 = vmatprep.subr.mxu0 0.0
  %147 = vmatpush1.msra.mxu0 %v132
  %148 = vmatprep.subr.mxu0 0.0
  %149 = vmatpush1.msra.mxu0 %v131
  %150 = vmatprep.subr.mxu0 0.0
  %151 = vmatpush1.msra.mxu0 %v130
  %152 = vmatprep.subr.mxu0 0.0
  %153 = vmatpush1.msra.mxu0 %v129
  %154 = vmatprep.subr.mxu0 0.0
  %155 = vmatpush1.msra.mxu0 %v128
  %156 = vmatprep.subr.mxu0 0.0
  %157 = vmatpush1.msra.mxu0 %v127
  %158 = vmatprep.subr.mxu0 0.0
  %159 = vmatpush1.msra.mxu0 %v126
  %160 = vmatprep.subr.mxu0 0.0
  %161 = vmatpush1.msra.mxu0 %v125
  %162 = vmatprep.subr.mxu0 0.0
  %163 = vmatpush1.msra.mxu0 %v124
  %164 = vmatprep.subr.mxu0 0.0
  %165 = vmatpush1.msra.mxu0 %v123
  %166 = vmatprep.subr.mxu0 0.0
  %167 = vmatpush1.msra.mxu0 %v122
  %168 = vmatprep.subr.mxu0 0.0
  %169 = vmatpush1.msra.mxu0 %v121
  %170 = vmatprep.subr.mxu0 0.0
  %171 = vmatpush1.msra.mxu0 %v120
  %172 = vmatprep.subr.mxu0 0.0
  %173 = vmatpush1.msra.mxu0 %v119
  %174 = vmatprep.subr.mxu0 0.0
  %175 = vmatpush2.msra.mxu0 0.0
  %176 = vmatprep.subr.mxu0 0.0
  %177 = vmatpush2.msra.mxu0 0.0
  %178 = vmatprep.subr.mxu0 0.0
  %179 = vmatpush2.msra.mxu0 0.0
  %180 = vmatprep.subr.mxu0 0.0
  %181 = vmatpush2.msra.mxu0 0.0
  %182 = vmatprep.subr.mxu0 0.0
  %183 = vmatpush2.msra.mxu0 0.0
  %184 = vmatprep.subr.mxu0 0.0
  %185 = vmatpush2.msra.mxu0 0.0
  %186 = vmatprep.subr.mxu0 0.0
  %187 = vmatpush2.msra.mxu0 0.0
  %188 = vmatprep.subr.mxu0 0.0
  %189 = vmatpush2.msra.mxu0 0.0
  %190 = vmatprep.subr.mxu0 0.0
  %191 = vmatpush2.msra.mxu0 0.0
  %192 = vmatprep.subr.mxu0 0.0
  %193 = vmatpush2.msra.mxu0 0.0
  %194 = vmatprep.subr.mxu0 0.0
  %195 = vmatpush2.msra.mxu0 0.0
  %196 = vmatprep.subr.mxu0 0.0
  %197 = vmatpush2.msra.mxu0 0.0
  %198 = vmatprep.subr.mxu0 0.0
  %199 = vmatpush2.msra.mxu0 0.0
  %200 = vmatprep.subr.mxu0 0.0
  %201 = vmatpush2.msra.mxu0 0.0
  %202 = vmatprep.subr.mxu0 0.0
  %203 = vmatpush2.msra.mxu0 0.0
  %204 = vmatprep.subr.mxu0 0.0
  %205 = vmatpush2.msra.mxu0 0.0
  %206 = vmatprep.mubr.f32.mxu0 0.0
  %207 = vmatmul.mubr.f32.gmra.mxu0 %v118
  %v208 = vpop.f32.mrf.mxu0
  %v209 = vadd.f32 %v140, %v208
  %v210 = vpop.f32.mrf.mxu0
  %211 = vdwg.mxu0
  %v212 = vmax.f32 %v209, 0.0
  %v213 = vld [vmem:[%s5] sm:$0xff]
  %v214 = vld [vmem:[%s5 + $0x8] sm:$0xff]
  %v215 = vld [vmem:[%s5 + $0x10] sm:$0xff]
  %v216 = vld [vmem:[%s5 + $0x18] sm:$0xff]
  %v217 = vld [vmem:[%s5 + $0x20] sm:$0xff]
  %v218 = vld [vmem:[%s5 + $0x28] sm:$0xff]
  %v219 = vld [vmem:[%s5 + $0x30] sm:$0xff]
  %v220 = vld [vmem:[%s5 + $0x38] sm:$0xff]
  %v221 = vld [vmem:[#allocation2] sm:$0x1]
  %v223 = vlaneseq
  %v224 = vshrl.u32 %v223, 7
  %v225 = vsub.s32 0, %v224
  %v226 = vrot.slane %v221, %v225
  %v229 = vsel %vm44, %v212, 0
  %231 = vmatprep.subr.mxu0 0.0
  %232 = vmatpush1.msra.mxu0 0.0
  %233 = vmatprep.subr.mxu0 0.0
  %234 = vmatpush1.msra.mxu0 0.0
  %235 = vmatprep.subr.mxu0 0.0
  %236 = vmatpush1.msra.mxu0 0.0
  %237 = vmatprep.subr.mxu0 0.0
  %238 = vmatpush1.msra.mxu0 0.0
  %239 = vmatprep.subr.mxu0 0.0
  %240 = vmatpush1.msra.mxu0 0.0
  %241 = vmatprep.subr.mxu0 0.0
  %242 = vmatpush1.msra.mxu0 0.0
  %243 = vmatprep.subr.mxu0 0.0
  %244 = vmatpush1.msra.mxu0 0.0
  %245 = vmatprep.subr.mxu0 0.0
  %246 = vmatpush1.msra.mxu0 0.0
  %247 = vmatprep.subr.mxu0 0.0
  %248 = vmatpush1.msra.mxu0 %v220
  %249 = vmatprep.subr.mxu0 0.0
  %250 = vmatpush1.msra.mxu0 %v219
  %251 = vmatprep.subr.mxu0 0.0
  %252 = vmatpush1.msra.mxu0 %v218
  %253 = vmatprep.subr.mxu0 0.0
  %254 = vmatpush1.msra.mxu0 %v217
  %255 = vmatprep.subr.mxu0 0.0
  %256 = vmatpush1.msra.mxu0 %v216
  %257 = vmatprep.subr.mxu0 0.0
  %258 = vmatpush1.msra.mxu0 %v215
  %259 = vmatprep.subr.mxu0 0.0
  %260 = vmatpush1.msra.mxu0 %v214
  %261 = vmatprep.subr.mxu0 0.0
  %262 = vmatpush1.msra.mxu0 %v213
  %263 = vmatprep.subr.mxu0 0.0
  %264 = vmatpush2.msra.mxu0 0.0
  %265 = vmatprep.subr.mxu0 0.0
  %266 = vmatpush2.msra.mxu0 0.0
  %267 = vmatprep.subr.mxu0 0.0
  %268 = vmatpush2.msra.mxu0 0.0
  %269 = vmatprep.subr.mxu0 0.0
  %270 = vmatpush2.msra.mxu0 0.0
  %271 = vmatprep.subr.mxu0 0.0
  %272 = vmatpush2.msra.mxu0 0.0
  %273 = vmatprep.subr.mxu0 0.0
  %274 = vmatpush2.msra.mxu0 0.0
  %275 = vmatprep.subr.mxu0 0.0
  %276 = vmatpush2.msra.mxu0 0.0
  %277 = vmatprep.subr.mxu0 0.0
  %278 = vmatpush2.msra.mxu0 0.0
  %279 = vmatprep.subr.mxu0 0.0
  %280 = vmatpush2.msra.mxu0 0.0
  %281 = vmatprep.subr.mxu0 0.0
  %282 = vmatpush2.msra.mxu0 0.0
  %283 = vmatprep.subr.mxu0 0.0
  %284 = vmatpush2.msra.mxu0 0.0
  %285 = vmatprep.subr.mxu0 0.0
  %286 = vmatpush2.msra.mxu0 0.0
  %287 = vmatprep.subr.mxu0 0.0
  %288 = vmatpush2.msra.mxu0 0.0
  %289 = vmatprep.subr.mxu0 0.0
  %290 = vmatpush2.msra.mxu0 0.0
  %291 = vmatprep.subr.mxu0 0.0
  %292 = vmatpush2.msra.mxu0 0.0
  %293 = vmatprep.subr.mxu0 0.0
  %294 = vmatpush2.msra.mxu0 0.0
  %295 = vmatprep.mubr.f32.mxu0 0.0
  %296 = vmatmul.mubr.f32.gmra.mxu0 %v229
  %v297 = vpop.f32.mrf.mxu0
  %v298 = vadd.f32 %v226, %v297
  %v299 = vpop.f32.mrf.mxu0
  %300 = vdwg.mxu0
  %vm301 = vcmask 7168
  %302 = vst.msk [vmem:[%s7] sm:$0xff] %vm301, %v298
  // Predicated region
  $region30: #{decoder_forward.1} parent=0 // pred_check
    _
  $region31: #{decoder_forward.1} parent=0 // pred_check_branch
    %304 = sbr.rel (0) target = $region33
  $region32: #{decoder_forward.1} parent=0 // pred_region
    _
  $region33: #{decoder_forward.1} parent=0 // pred_fallthru
    _
  // Predicated region
  $region34: #{decoder_forward.1} parent=0 // pred_check
    _
  $region35: #{decoder_forward.1} parent=0 // pred_check_branch
    %306 = sbr.rel (0) target = $region37
  $region36: #{decoder_forward.1} parent=0 // pred_region
    _
  $region37: #{decoder_forward.1} parent=0 // pred_fallthru
    _

</llo_original>
